<compile_context>
chip_gen: v5e
topology: v5e:2x2
jax: 0.10.0
libtpu: 0.0.40
codegen_flags: <defaults>
</compile_context>

<pallas_src>
import jax
import jax.numpy as jnp
from jax.experimental import pallas as pl
from jax.experimental.pallas import tpu as pltpu


def _round_up(x, m):
    return ((x + m - 1) // m) * m


def _sublane_align(dtype):
    itemsize = jnp.dtype(dtype).itemsize
    return {4: 8, 2: 16, 1: 32}.get(itemsize, 8)


def _pick_batch_tile(b, bytes_per_row, align, max_tb=512, budget_bytes=12 << 20):
    """Largest sublane-aligned batch tile whose double-buffered blocks fit a
    conservative VMEM budget (safe on v5e's 16 MiB scoped default and v7x's
    smaller per-TC VMEM), capped at max_tb, and split so the grid has >= 2
    steps when the batch allows (so "parallel" can shard across v7x's 2 TCs)."""
    cap = max(align, (budget_bytes // (2 * bytes_per_row)) // align * align)
    tb = min(max_tb, cap)
    b_al = _round_up(b, align)
    if b_al <= tb:
        if b_al >= 2 * align:
            tb = max(align, _round_up((b_al + 1) // 2, align))  # >= 2 grid steps
        else:
            tb = b_al
    return int(tb)


def _critic_value_kernel(data_ref, a_ref, wd_ref, wa_ref, c0_ref, out_ref):
    # Cast after load: inputs stream HBM->VMEM in their native (possibly
    # narrow) dtype; widening happens on the VPU, not via an extra HBM pass.
    d = data_ref[...].astype(jnp.float32)          # (TB, C*HW)
    av = a_ref[...].astype(jnp.float32)            # (TB, HW)
    wd = wd_ref[...]                               # (1, C*HW)  resident
    wa = wa_ref[...]                               # (1, HW)    resident
    c0 = c0_ref[0, 0]                              # scalar

    # Weighted sums: VPU multiply + XLU lane reduce.  Output feature dim is 1
    # and batch tiles are modest, so the MXU would be ~1% utilized -- skip it.
    vd = jnp.sum(d * wd, axis=-1, keepdims=True)   # (TB, 1)
    va = jnp.sum(av * wa, axis=-1, keepdims=True)  # (TB, 1)
    v = vd + va + c0                               # (TB, 1)

    # Lane-dense store (unmasked vst); the wrapper slices column 0.
    out_ref[...] = jnp.broadcast_to(v, out_ref.shape).astype(out_ref.dtype)


def fold_params(params):
    """Fold conv + x_fc + a_fc + v_fc (all linear) into one affine map."""
    convw, xw, xb, aw, ab, vwx, vwa, vb = params
    wx = xw @ vwx                                          # (HW, 1)
    wd = convw[0][:, None] * wx[:, 0][None, :]             # (C, HW)
    wd = wd.reshape(1, -1).astype(jnp.float32)             # (1, C*HW)
    wa = (aw @ vwa).reshape(1, -1).astype(jnp.float32)     # (1, HW)
    c0 = (xb @ vwx + ab @ vwa + vb).astype(jnp.float32)    # (1, 1)
    return wd, wa, c0


def critic_value(data, a, folded):
    """data: (B, C, H, W), a: (B, 1, H, W) -> (B, 1) float32."""
    wd, wa, c0 = folded
    b, c, h, w = data.shape
    hw = h * w
    chw = c * hw

    # Keep native storage dtype; no wrapper-side astype/pad (both would add a
    # full extra HBM pass to a purely bandwidth-bound kernel).
    data_f = data.reshape(b, chw)
    a_f = a.reshape(b, hw)

    align = max(_sublane_align(data_f.dtype), _sublane_align(a_f.dtype))
    bytes_per_row = (chw * data_f.dtype.itemsize
                     + hw * a_f.dtype.itemsize
                     + 128 * 4)
    tb = _pick_batch_tile(b, bytes_per_row, align)
    grid = (pl.cdiv(b, tb),)

    flops = 2 * b * (chw + hw)
    bytes_accessed = (b * chw * data_f.dtype.itemsize
                      + b * hw * a_f.dtype.itemsize
                      + 4 * (chw + hw + 1)
                      + b * 128 * 4)

    out = pl.pallas_call(
        _critic_value_kernel,
        out_shape=jax.ShapeDtypeStruct((b, 128), jnp.float32),
        grid=grid,
        in_specs=[
            pl.BlockSpec((tb, chw), lambda i: (i, 0)),   # data (batch-tiled)
            pl.BlockSpec((tb, hw), lambda i: (i, 0)),    # a    (batch-tiled)
            pl.BlockSpec((1, chw), lambda i: (0, 0)),    # Wd   (resident)
            pl.BlockSpec((1, hw), lambda i: (0, 0)),     # Wa   (resident)
            pl.BlockSpec((1, 1), lambda i: (0, 0)),      # c0   (resident)
        ],
        out_specs=pl.BlockSpec((tb, 128), lambda i: (i, 0)),
        compiler_params=pltpu.CompilerParams(
            dimension_semantics=("parallel",)),
        cost_estimate=pl.CostEstimate(
            flops=flops, transcendentals=0, bytes_accessed=bytes_accessed),
    )(data_f, a_f, wd, wa, c0)

    # TODO(synk): for very large B, a per-tile sublane->lane transpose (XLU)
    # would shrink the replicated writeback to a dense (B/128, 128) slab.
    return out[:, :1]


def make_params(key, c, h, w, down_ratio=8):
    """Deterministic synthetic parameters matching the PyTorch module shapes."""
    hw = h * w
    hidden = hw // down_ratio
    ks = jax.random.split(key, 7)
    s = 0.05
    convw = s * jax.random.normal(ks[0], (1, c), jnp.float32)        # conv (1,C,1,1) squeezed
    xw = s * jax.random.normal(ks[1], (hw, hidden), jnp.float32)     # x_fc.weight.T
    xb = s * jax.random.normal(ks[2], (1, hidden), jnp.float32)      # x_fc.bias
    aw = s * jax.random.normal(ks[3], (hw, hidden), jnp.float32)     # a_fc.weight.T
    ab = s * jax.random.normal(ks[4], (1, hidden), jnp.float32)      # a_fc.bias
    vw = s * jax.random.normal(ks[5], (2 * hidden, 1), jnp.float32)  # v_fc.weight.T
    vb = s * jax.random.normal(ks[6], (1, 1), jnp.float32)           # v_fc.bias
    vwx, vwa = vw[:hidden], vw[hidden:]
    return convw, xw, xb, aw, ab, vwx, vwa, vb


def _reference(data, a, params):
    """Pure-JAX reference of the (unfolded) PyTorch forward."""
    convw, xw, xb, aw, ab, vwx, vwa, vb = params
    b, c, h, w = data.shape
    hw = h * w
    x = jnp.einsum('bchw,c->bhw', data, convw[0]).reshape(b, hw)  # 1x1 conv, no bias
    x = x @ xw + xb
    af = a.reshape(b, hw) @ aw + ab
    xa = jnp.concatenate([x, af], axis=1)
    return xa @ jnp.concatenate([vwx, vwa], axis=0) + vb


if __name__ == "__main__":
    B, C, H, W = 2, 4, 16, 16
    key = jax.random.PRNGKey(0)
    k_data, k_a, k_p = jax.random.split(key, 3)

    data = jax.random.normal(k_data, (B, C, H, W), jnp.float32)
    a = jax.random.normal(k_a, (B, 1, H, W), jnp.float32)  # flattens to (B, H*W) like a.view(bb, -1)
    params = make_params(k_p, C, H, W, down_ratio=8)

    folded = fold_params(params)           # one-time offline weight fold
    folded = jax.tree.map(jax.block_until_ready, folded)

    v = critic_value(data, a, folded)
    v = jax.block_until_ready(v)

    v_ref = _reference(data, a, params)
    assert v.shape == (B, 1)
    assert jnp.allclose(v, v_ref, atol=1e-4, rtol=1e-4), "mismatch vs reference"

    print("KERNEL_OK")
</pallas_src>

<mosaic_0001>
module attributes {stable_mosaic.version = 11 : i64} {
  func.func @_critic_value_kernel(%arg0: i32, %arg1: memref<8x1024xf32, #tpu.memory_space<vmem>>, %arg2: memref<8x256xf32, #tpu.memory_space<vmem>>, %arg3: memref<1x1024xf32, #tpu.memory_space<vmem>>, %arg4: memref<1x256xf32, #tpu.memory_space<vmem>>, %arg5: memref<1x1xf32, #tpu.memory_space<vmem>>, %arg6: memref<8x128xf32, #tpu.memory_space<vmem>>) attributes {dimension_semantics = [#tpu.dimension_semantics<parallel>], iteration_bounds = array<i64: 1>, scalar_prefetch = 0 : i64, scratch_operands = 0 : i64, tpu.core_type = #tpu.core_type<tc>, window_params = [{transform_indices = @transform_0, window_bounds = array<i64: 8, 1024>}, {transform_indices = @transform_1, window_bounds = array<i64: 8, 256>}, {pipeline_mode = #tpu.pipeline_mode<synchronous>, transform_indices = @transform_2, window_bounds = array<i64: 1, 1024>}, {pipeline_mode = #tpu.pipeline_mode<synchronous>, transform_indices = @transform_3, window_bounds = array<i64: 1, 256>}, {pipeline_mode = #tpu.pipeline_mode<synchronous>, transform_indices = @transform_4, window_bounds = array<i64: 1, 1>}, {transform_indices = @transform_5, window_bounds = array<i64: 8, 128>}]} {
    %c0 = arith.constant 0 : index
    %c0_0 = arith.constant 0 : index
    %0 = vector.load %arg1[%c0, %c0_0] : memref<8x1024xf32, #tpu.memory_space<vmem>>, vector<8x1024xf32>
    %c0_1 = arith.constant 0 : index
    %c0_2 = arith.constant 0 : index
    %1 = vector.load %arg2[%c0_1, %c0_2] : memref<8x256xf32, #tpu.memory_space<vmem>>, vector<8x256xf32>
    %c0_3 = arith.constant 0 : index
    %c0_4 = arith.constant 0 : index
    %2 = vector.load %arg3[%c0_3, %c0_4] : memref<1x1024xf32, #tpu.memory_space<vmem>>, vector<1x1024xf32>
    %c0_5 = arith.constant 0 : index
    %c0_6 = arith.constant 0 : index
    %3 = vector.load %arg4[%c0_5, %c0_6] : memref<1x256xf32, #tpu.memory_space<vmem>>, vector<1x256xf32>
    %c0_7 = arith.constant 0 : index
    %c0_8 = arith.constant 0 : index
    %4 = vector.load %arg5[%c0_7, %c0_8] : memref<1x1xf32, #tpu.memory_space<vmem>>, vector<1x1xf32>
    %5 = vector.extract %4[0, 0] : f32 from vector<1x1xf32>
    %6 = vector.broadcast %2 : vector<1x1024xf32> to vector<8x1024xf32>
    %7 = arith.mulf %0, %6 : vector<8x1024xf32>
    %cst = arith.constant dense<0.000000e+00> : vector<8xf32>
    %8 = vector.multi_reduction <add>, %7, %cst [1] : vector<8x1024xf32> to vector<8xf32>
    %9 = vector.shape_cast %8 : vector<8xf32> to vector<8x1xf32>
    %10 = vector.broadcast %3 : vector<1x256xf32> to vector<8x256xf32>
    %11 = arith.mulf %1, %10 : vector<8x256xf32>
    %cst_9 = arith.constant dense<0.000000e+00> : vector<8xf32>
    %12 = vector.multi_reduction <add>, %11, %cst_9 [1] : vector<8x256xf32> to vector<8xf32>
    %13 = vector.shape_cast %12 : vector<8xf32> to vector<8x1xf32>
    %14 = arith.addf %9, %13 : vector<8x1xf32>
    %15 = vector.broadcast %5 : f32 to vector<8x1xf32>
    %16 = arith.addf %14, %15 : vector<8x1xf32>
    %17 = vector.shape_cast %16 : vector<8x1xf32> to vector<8x1xf32>
    %18 = vector.broadcast %17 : vector<8x1xf32> to vector<8x128xf32>
    %c0_10 = arith.constant 0 : index
    %c0_11 = arith.constant 0 : index
    %19 = vector.load %arg6[%c0_10, %c0_11] : memref<8x128xf32, #tpu.memory_space<vmem>>, vector<8x128xf32>
    tpu.vector_store %arg6[%c0_10, %c0_11], %18 {strides = array<i32>} : memref<8x128xf32, #tpu.memory_space<vmem>>, vector<8x128xf32>,
    return
  }
  func.func @transform_0(%arg0: i32) -> (i32, i32) {
    %c0_i32 = arith.constant 0 : i32
    %c0_i32_0 = arith.constant 0 : i32
    return %arg0, %c0_i32 : i32, i32
  }
  func.func @transform_1(%arg0: i32) -> (i32, i32) {
    %c0_i32 = arith.constant 0 : i32
    %c0_i32_0 = arith.constant 0 : i32
    return %arg0, %c0_i32 : i32, i32
  }
  func.func @transform_2(%arg0: i32) -> (i32, i32) {
    %c0_i32 = arith.constant 0 : i32
    %c0_i32_0 = arith.constant 0 : i32
    %c0_i32_1 = arith.constant 0 : i32
    return %c0_i32, %c0_i32_0 : i32, i32
  }
  func.func @transform_3(%arg0: i32) -> (i32, i32) {
    %c0_i32 = arith.constant 0 : i32
    %c0_i32_0 = arith.constant 0 : i32
    %c0_i32_1 = arith.constant 0 : i32
    return %c0_i32, %c0_i32_0 : i32, i32
  }
  func.func @transform_4(%arg0: i32) -> (i32, i32) {
    %c0_i32 = arith.constant 0 : i32
    %c0_i32_0 = arith.constant 0 : i32
    %c0_i32_1 = arith.constant 0 : i32
    return %c0_i32, %c0_i32_0 : i32, i32
  }
  func.func @transform_5(%arg0: i32) -> (i32, i32) {
    %c0_i32 = arith.constant 0 : i32
    %c0_i32_0 = arith.constant 0 : i32
    return %arg0, %c0_i32 : i32, i32
  }
}

</mosaic_0001>

<llo_original>
// kernel: tpu_custom_call.1
$region0: #{tpu_custom_call.1}
  #allocation0 [shape = 'u32[]', space=smem, size = 0x4, offset = 0x4, fixed_abs, tag = 'smem constant byte address 0x4 - core index']
  #allocation1 [shape = 'u32[72,128]{1,0:T(1,128)}', space=vmem, size = 0x9000, scoped, tag = 'internal scratch']
  #allocation2 [shape = 'f32[1,1]{1,0:T(1,128)S(1)}', space=vmem, size = 0x200, scoped, tag = 'scoped memory for tpu_custom_call.1']
  %s0 = inlined_call_operand.hbm [shape: f32[2,1024], index: 0, kind: input, shape index: {}]
  %s1 = inlined_call_operand.hbm [shape: f32[2,256], index: 1, kind: input, shape index: {}]
  %s2 = inlined_call_operand.hbm [shape: f32[1,1024], index: 2, kind: input, shape index: {}]
  %s3 = inlined_call_operand.vmem [shape: f32[1,256], index: 3, kind: input, shape index: {}]
  %s4 = inlined_call_operand.<no memory space> [shape: f32[1,1], index: 4, kind: input, shape index: {}]
  %s5 = inlined_call_operand.hbm [shape: f32[2,128], index: 5, kind: output, shape index: {}]
  %s6 = sld [smem:[#allocation0]]
  $region42: #{tpu_custom_call.1} parent=0
    _
  %s8 = ssub.s32 1, %s6
  %s9 = scalar_select 0, %s8, %s6
  %v10 = vstv %s4
  %11 = vst [vmem:[#allocation2] sm:$0x1] %v10
  $region1: #{tpu_custom_call.1} parent=0
    #allocation3 [shape = 'u8[32768]{0}', space=vmem, size = 0x8000, scoped, tag = 'input window, operand 0, single buffered']
    #allocation4 [shape = 's32[1]{0}', space=sflag, size = 0x4, scoped, tag = 'scoped memory for tpu_custom_call.1']
    #allocation5 [shape = 's32[1]{0}', space=sflag, size = 0x4, scoped, tag = 'scoped memory for tpu_custom_call.1']
    #allocation6 [shape = 'u8[8192]{0}', space=vmem, size = 0x2000, scoped, tag = 'input window, operand 1, single buffered']
    #allocation7 [shape = 's32[1]{0}', space=sflag, size = 0x4, scoped, tag = 'scoped memory for tpu_custom_call.1']
    #allocation8 [shape = 'u8[4096]{0}', space=vmem, size = 0x1000, scoped, tag = 'input window, operand 2, single buffered']
    #allocation9 [shape = 'u8[4096]{0}', space=vmem, size = 0x1000, scoped, tag = 'output window, operand 0, single buffered']
    %12 = vsyncpa [#allocation4], 0
    %13 = vsyncpa [#allocation7], 0
    %14 = vsyncpa [#allocation5], 0
    // Predicated region
    $region2: #{tpu_custom_call.1} parent=1 // pred_check
      _
    $region3: #{tpu_custom_call.1} parent=1 // pred_check_branch
      %16 = sbr.rel (0) target = $region5
    $region4: #{tpu_custom_call.1} parent=1 // pred_region
      %18 = vsyncadd [#allocation4], 768
      %s19 = sshll.u32 %s0, 4
      %s20 = int_to_ptr.hbm [resolvable:$true] %s19
      %s21 = sshll.u32 [#allocation3], 4
      %s22 = int_to_ptr.vmem [resolvable:$true] %s21
      %27 = dma.hbm_to_vmem [thread:$0]  %s20, 256, %s22, [#allocation4], 256, 256, 16
    $region5: #{tpu_custom_call.1} parent=1 // pred_fallthru
      _
    // Predicated region
    $region6: #{tpu_custom_call.1} parent=1 // pred_check
      _
    $region7: #{tpu_custom_call.1} parent=1 // pred_check_branch
      %29 = sbr.rel (0) target = $region9
    $region8: #{tpu_custom_call.1} parent=1 // pred_region
      %31 = vsyncadd [#allocation7], 192
      %s32 = sshll.u32 %s1, 4
      %s33 = int_to_ptr.hbm [resolvable:$true] %s32
      %s34 = sshll.u32 [#allocation6], 4
      %s35 = int_to_ptr.vmem [resolvable:$true] %s34
      %40 = dma.hbm_to_vmem [thread:$0]  %s33, 64, %s35, [#allocation7], 64, 64, 4
    $region9: #{tpu_custom_call.1} parent=1 // pred_fallthru
      _
    // Predicated region
    $region10: #{tpu_custom_call.1} parent=1 // pred_check
      _
    $region11: #{tpu_custom_call.1} parent=1 // pred_check_branch
      %42 = sbr.rel (0) target = $region13
    $region12: #{tpu_custom_call.1} parent=1 // pred_region
      %44 = vsyncadd [#allocation7], 0
      %s46 = sshll.u32 %s2, 4
      %s47 = int_to_ptr.hbm [resolvable:$true] %s46
      %s48 = sshll.u32 [#allocation8], 4
      %s49 = int_to_ptr.vmem [resolvable:$true] %s48
      %51 = dma.hbm_to_vmem [thread:$0]  %s47, 128, %s49, [#allocation7]
    $region13: #{tpu_custom_call.1} parent=1 // pred_fallthru
      _
    // Predicated region
    $region14: #{tpu_custom_call.1} parent=1 // pred_check
      _
    $region15: #{tpu_custom_call.1} parent=1 // pred_check_branch
      %53 = sbr.rel (0) target = $region17
    $region16: #{tpu_custom_call.1} parent=1 // pred_region
      _
    $region17: #{tpu_custom_call.1} parent=1 // pred_fallthru
      _
    // Predicated region
    $region18: #{tpu_custom_call.1} parent=1 // pred_check
      _
    $region19: #{tpu_custom_call.1} parent=1 // pred_check_branch
      %55 = sbr.rel (0) target = $region21
    $region20: #{tpu_custom_call.1} parent=1 // pred_region
      _
    $region21: #{tpu_custom_call.1} parent=1 // pred_fallthru
      _
    // Predicated region
    $region22: #{tpu_custom_call.1} parent=1 // pred_check
      _
    $region23: #{tpu_custom_call.1} parent=1 // pred_check_branch
      %57 = sbr.rel (0) target = $region25
    $region24: #{tpu_custom_call.1} parent=1 // pred_region
      %59 = dma.done [#allocation4], 1024
    $region25: #{tpu_custom_call.1} parent=1 // pred_fallthru
      _
    // Predicated region
    $region26: #{tpu_custom_call.1} parent=1 // pred_check
      _
    $region27: #{tpu_custom_call.1} parent=1 // pred_check_branch
      %61 = sbr.rel (0) target = $region29
    $region28: #{tpu_custom_call.1} parent=1 // pred_region
      %63 = dma.done [#allocation7], 256
    $region29: #{tpu_custom_call.1} parent=1 // pred_fallthru
      _
    // Predicated region
    $region30: #{tpu_custom_call.1} parent=1 // pred_check
      _
    $region31: #{tpu_custom_call.1} parent=1 // pred_check_branch
      %65 = sbr.rel (0) target = $region33
    $region32: #{tpu_custom_call.1} parent=1 // pred_region
      %67 = dma.done [#allocation7], 128
    $region33: #{tpu_custom_call.1} parent=1 // pred_fallthru
      _
    %v68 = vld [vmem:[#allocation3] sm:$0xff]
    %v69 = vld [vmem:[#allocation3 + $0x8] sm:$0xff]
    %v70 = vld [vmem:[#allocation3 + $0x10] sm:$0xff]
    %v71 = vld [vmem:[#allocation3 + $0x18] sm:$0xff]
    %v72 = vld [vmem:[#allocation3 + $0x20] sm:$0xff]
    %v73 = vld [vmem:[#allocation3 + $0x28] sm:$0xff]
    %v74 = vld [vmem:[#allocation3 + $0x30] sm:$0xff]
    %v75 = vld [vmem:[#allocation3 + $0x38] sm:$0xff]
    %v76 = vld [vmem:[#allocation6] sm:$0xf]
    %v77 = vld [vmem:[#allocation6 + $0x4] sm:$0xf]
    %v78 = vld [vmem:[#allocation6 + $0x8] sm:$0xf]
    %v79 = vld [vmem:[#allocation6 + $0xc] sm:$0xf]
    %v80 = vld [vmem:[#allocation8] sm:$0xff]
    %v81 = vld [vmem:[%s3] sm:$0x3]
    %v82 = vld [vmem:[#allocation2] sm:$0x1]
    %s83 = vtos %v82
    %v85 = vperm.slane %v80, 0
    %v86 = vperm.slane %v80, 1
    %v87 = vperm.slane %v80, 2
    %v88 = vperm.slane %v80, 3
    %v89 = vperm.slane %v80, 4
    %v90 = vperm.slane %v80, 5
    %v91 = vperm.slane %v80, 6
    %v92 = vperm.slane %v80, 7
    %v93 = vrot.slane %v86, 6
    %v94 = vrot.slane %v87, 4
    %v95 = vrot.slane %v88, 2
    %v96 = vrot.slane %v90, 6
    %v97 = vrot.slane %v91, 4
    %v98 = vrot.slane %v92, 2
    %vm99 = vcmask 1041408
    %v100 = vsel %vm99, %v85, %v93
    %vm101 = vcmask 1045508
    %v102 = vsel %vm101, %v94, %v95
    %vm103 = vcmask 1043456
    %v104 = vsel %vm103, %v100, %v102
    %v105 = vsel %vm99, %v89, %v96
    %v106 = vsel %vm101, %v97, %v98
    %v107 = vsel %vm103, %v105, %v106
    %vm108 = vcmask 1043458
    %v109 = vsel %vm108, %v85, %v93
    %vm110 = vcmask 1045504
    %v111 = vsel %vm110, %v95, %v94
    %vm112 = vcmask 1045506
    %v113 = vsel %vm112, %v109, %v111
    %v114 = vrot.slane %v113, 2
    %v115 = vsel %vm108, %v89, %v96
    %v116 = vsel %vm110, %v98, %v97
    %v117 = vsel %vm112, %v115, %v116
    %v118 = vrot.slane %v117, 2
    %v119 = vsel %vm101, %v85, %v93
    %v120 = vsel %vm99, %v94, %v95
    %v121 = vsel %vm103, %v120, %v119
    %v122 = vrot.slane %v121, 4
    %v123 = vsel %vm101, %v89, %v96
    %v124 = vsel %vm99, %v97, %v98
    %v125 = vsel %vm103, %v124, %v123
    %v126 = vrot.slane %v125, 4
    %v127 = vsel %vm110, %v93, %v85
    %v128 = vsel %vm108, %v94, %v95
    %v129 = vsel %vm112, %v128, %v127
    %v130 = vrot.slane %v129, 6
    %v131 = vsel %vm110, %v96, %v89
    %v132 = vsel %vm108, %v97, %v98
    %v133 = vsel %vm112, %v132, %v131
    %v134 = vrot.slane %v133, 6
    %v143 = vmul.f32 %v68, %v104
    %v144 = vmul.f32 %v69, %v107
    %v145 = vmul.f32 %v70, %v114
    %v146 = vmul.f32 %v71, %v118
    %v147 = vmul.f32 %v72, %v122
    %v148 = vmul.f32 %v73, %v126
    %v149 = vmul.f32 %v74, %v130
    %v150 = vmul.f32 %v75, %v134
    %159 = vst [vmem:[#allocation1] ss:$4 sm:$0xff] %v143
    %s160 = scalar_lea.vmem [#allocation1], 1
    %161 = vst [vmem:[%s160] ss:$4 sm:$0xff] %v145
    %s162 = scalar_lea.vmem [#allocation1], 2
    %163 = vst [vmem:[%s162] ss:$4 sm:$0xff] %v147
    %s164 = scalar_lea.vmem [#allocation1], 3
    %165 = vst [vmem:[%s164] ss:$4 sm:$0xff] %v149
    %s166 = scalar_lea.vmem [#allocation1], 32
    %167 = vst [vmem:[%s166] ss:$4 sm:$0xff] %v144
    %s168 = scalar_lea.vmem [#allocation1], 33
    %169 = vst [vmem:[%s168] ss:$4 sm:$0xff] %v146
    %s170 = scalar_lea.vmem [#allocation1], 34
    %171 = vst [vmem:[%s170] ss:$4 sm:$0xff] %v148
    %s172 = scalar_lea.vmem [#allocation1], 35
    %173 = vst [vmem:[%s172] ss:$4 sm:$0xff] %v150
    %v174 = vld.sshfl [vmem:[#allocation1] sm:$0xff pattern:$0x73625140]
    %v175 = vld.sshfl [vmem:[#allocation1 + $0x8] sm:$0xff pattern:$0x73625140]
    %v176 = vld.sshfl [vmem:[#allocation1 + $0x10] sm:$0xff pattern:$0x73625140]
    %v177 = vld.sshfl [vmem:[#allocation1 + $0x18] sm:$0xff pattern:$0x73625140]
    %v178 = vld.sshfl [vmem:[#allocation1 + $0x20] sm:$0xff pattern:$0x73625140]
    %v179 = vld.sshfl [vmem:[#allocation1 + $0x28] sm:$0xff pattern:$0x73625140]
    %v180 = vld.sshfl [vmem:[#allocation1 + $0x30] sm:$0xff pattern:$0x73625140]
    %v181 = vld.sshfl [vmem:[#allocation1 + $0x38] sm:$0xff pattern:$0x73625140]
    %v190 = vadd.f32 %v174, %v175
    %v191 = vadd.f32 %v190, %v176
    %v192 = vadd.f32 %v191, %v177
    %v193 = vadd.f32 %v192, %v178
    %v194 = vadd.f32 %v193, %v179
    %v195 = vadd.f32 %v194, %v180
    %v196 = vadd.f32 %v195, %v181
    %197 = vadd.xlane.f32.xlu0 %v196
    %v198 = vpop.xlane.xlu0 %197
    %v200 = vperm.slane %v81, 0
    %v201 = vperm.slane %v81, 1
    %v202 = vrot.slane %v201, 6
    %v203 = vsel %vm99, %v200, %v202
    %v204 = vsel %vm108, %v200, %v202
    %v205 = vrot.slane %v204, 2
    %v206 = vsel %vm101, %v200, %v202
    %v207 = vrot.slane %v206, 4
    %v208 = vsel %vm110, %v202, %v200
    %v209 = vrot.slane %v208, 6
    %v214 = vmul.f32 %v76, %v203
    %v215 = vmul.f32 %v77, %v205
    %v216 = vmul.f32 %v78, %v207
    %v217 = vmul.f32 %v79, %v209
    %222 = vst [vmem:[#allocation1] ss:$4 sm:$0xff] %v214
    %s223 = scalar_lea.vmem [#allocation1], 1
    %224 = vst [vmem:[%s223] ss:$4 sm:$0xff] %v215
    %s225 = scalar_lea.vmem [#allocation1], 2
    %226 = vst [vmem:[%s225] ss:$4 sm:$0xff] %v216
    %s227 = scalar_lea.vmem [#allocation1], 3
    %228 = vst [vmem:[%s227] ss:$4 sm:$0xff] %v217
    %v229 = vld.sshfl [vmem:[#allocation1] sm:$0xff pattern:$0x73625140]
    %v230 = vld.sshfl [vmem:[#allocation1 + $0x8] sm:$0xff pattern:$0x73625140]
    %v233 = vadd.f32 %v229, %v230
    %234 = vadd.xlane.f32.xlu0 %v233
    %v235 = vpop.xlane.xlu0 %234
    %v236 = vadd.f32 %v198, %v235
    %v237 = vstv %s83
    %v238 = vadd.f32 %v236, %v237
    %239 = vst [vmem:[#allocation9] sm:$0xff] %v238
    // Predicated region
    $region34: #{tpu_custom_call.1} parent=1 // pred_check
      _
    $region35: #{tpu_custom_call.1} parent=1 // pred_check_branch
      %241 = sbr.rel (0) target = $region37
    $region36: #{tpu_custom_call.1} parent=1 // pred_region
      %243 = vsyncadd [#allocation5], 96
      %s244 = sshll.u32 [#allocation9], 4
      %s245 = int_to_ptr.vmem [resolvable:$true] %s244
      %s246 = sshll.u32 %s5, 4
      %s247 = int_to_ptr.hbm [resolvable:$true] %s246
      %252 = dma.vmem_to_hbm [thread:$0]  %s245, 32, %s247, [#allocation5], 32, 32, 2
    $region37: #{tpu_custom_call.1} parent=1 // pred_fallthru
      _
    // Predicated region
    $region38: #{tpu_custom_call.1} parent=1 // pred_check
      _
    $region39: #{tpu_custom_call.1} parent=1 // pred_check_branch
      %254 = sbr.rel (0) target = $region41
    $region40: #{tpu_custom_call.1} parent=1 // pred_region
      %256 = dma.done [#allocation5], 128
    $region41: #{tpu_custom_call.1} parent=1 // pred_fallthru
      _
    %257 = vsyncpa [#allocation4], 1
    %258 = vsyncpa [#allocation7], 1
    %259 = vsyncpa [#allocation5], 1

</llo_original>
